<compile_context>
chip_gen: v7x
topology: tpu7x:2x2x1
jax: 0.10.0
libtpu: 0.0.40
codegen_flags: <defaults>
</compile_context>

<pallas_src>
import jax
import jax.numpy as jnp
from jax.experimental import pallas as pl
from jax.experimental.pallas import tpu as pltpu


def gconv_classifier_kernel(adj_ref, x_ref, org_ref,
                            w1_ref, b1_ref, w2c_ref, wco_ref, ball_ref, out_ref):
    TB, N, D = x_ref.shape
    H = w1_ref.shape[1]
    cdt = w1_ref.dtype                         # MXU operand dtype (f32, or bf16 on v6e/v7x)

    adj = adj_ref[...]                         # (TB, N, N) normalized adjacency tile
    x = x_ref[...]                             # (TB, N, D) node features

    # --- layer 1, re-associated: (A @ X) @ W1 --------------------------------------
    ax = jnp.einsum('bnm,bmd->bnd', adj, x,
                    preferred_element_type=jnp.float32)                   # (TB, N, D) f32
    # one fused feature projection for the whole batch tile -> TB*N MXU rows
    h1 = jnp.dot(ax.reshape(TB * N, D).astype(cdt), w1_ref[...],
                 preferred_element_type=jnp.float32)                      # (TB*N, H) f32
    h1 = jnp.maximum(h1 + b1_ref[...], 0.0)    # f32 bias + relu (dropout = identity, eval)

    # --- node mean folded through layer 2: pooled_h1 = mean_rows(A) @ h1 -----------
    # mean over the row index n is a cheap sublane reduce on the adjacency tile that is
    # already resident in VMEM; the contraction keeps the node index on the lane axis.
    madj = jnp.mean(adj.astype(jnp.float32), axis=1, keepdims=True)       # (TB, 1, N) f32
    ph1 = jnp.einsum('bon,bnh->boh', madj.astype(cdt),
                     h1.reshape(TB, N, H).astype(cdt),
                     preferred_element_type=jnp.float32)                  # (TB, 1, H) f32

    # --- fused layer-2 + classifier:  ph1 @ (W2 @ Wc_g) + org @ Wc_o + b_all --------
    logits = (jnp.dot(ph1.reshape(TB, H).astype(cdt), w2c_ref[...],
                      preferred_element_type=jnp.float32)
              + jnp.dot(org_ref[...], wco_ref[...],
                        preferred_element_type=jnp.float32)
              + ball_ref[...])                                            # (TB, CP) f32
    out_ref[...] = logits.astype(out_ref.dtype)     # lane-dense 128-wide unmasked store


def graphconv_organism_classifier(adj_norm, x, org_emb, w1, b1, w2, b2, wc, bc,
                                  *, compute_dtype=jnp.float32):
    """adj_norm: (B,N,N) f32, x: (B,N,D) f32, org_emb: (B,D) f32 (pre-gathered rows),
    w1:(D,H) b1:(1,H) w2:(H,D) b2:(1,D) wc:(2D,C) bc:(1,C). Returns (B, C) f32 logits."""
    B, N, D = x.shape
    H = w1.shape[1]
    C = bc.shape[-1]
    CP = ((C + 127) // 128) * 128            # pad classifier lanes -> unmasked stores

    # Batch tile: whole batch when small (single grid step, no per-step overhead),
    # otherwise sublane-aligned 8-sample tiles so both v7x TensorCores get work.
    TB = B if B <= 8 else 8
    Bp = ((B + TB - 1) // TB) * TB
    if Bp != B:                              # pad batch instead of asserting divisibility
        pad = Bp - B
        adj_norm = jnp.pad(adj_norm, ((0, pad), (0, 0), (0, 0)))
        x = jnp.pad(x, ((0, pad), (0, 0), (0, 0)))
        org_emb = jnp.pad(org_emb, ((0, pad), (0, 0)))
    grid = (Bp // TB,)

    # Weights-only folds (done once; independent of batch/activations):
    #   classifier concat split as pooled @ Wc[:D] + org @ Wc[D:],
    #   layer-2 weight fused with the graph half: W2c = W2 @ Wc[:D],
    #   combined bias b_all = b2 @ Wc[:D] + bc, all zero-padded to CP lanes.
    wc_g = wc[:D, :]                                                      # (D, C)
    wc_o = wc[D:, :]                                                      # (D, C)
    w2c = jnp.zeros((H, CP), jnp.float32).at[:, :C].set(w2 @ wc_g)        # (H, CP)
    wco = jnp.zeros((D, CP), jnp.float32).at[:, :C].set(wc_o)             # (D, CP)
    ball = jnp.zeros((1, CP), jnp.float32).at[:, :C].set(b2 @ wc_g + bc)  # (1, CP)

    # MXU-operand dtype cast (bf16 on v6e/v7x); biases stay f32 so all elementwise work
    # (bias add, relu, mean, accumulation) remains f32 — safe on v5e's f32-only VPU.
    cdt = compute_dtype
    adj_c, x_c, org_c = adj_norm.astype(cdt), x.astype(cdt), org_emb.astype(cdt)
    w1_c, w2c_c, wco_c = w1.astype(cdt), w2c.astype(cdt), wco.astype(cdt)

    # TODO(synk): if N is ever scaled up (N >~ 2k), add a node-tile grid axis for the
    # adjacency/feature blocks (or set vmem_limit_bytes) so the (TB,N,N) block stays
    # inside v7x's 64 MiB VMEM.
    out = pl.pallas_call(
        gconv_classifier_kernel,
        out_shape=jax.ShapeDtypeStruct((Bp, CP), jnp.float32),
        grid_spec=pltpu.PrefetchScalarGridSpec(
            num_scalar_prefetch=0,
            grid=grid,
            in_specs=[
                pl.BlockSpec((TB, N, N), lambda i: (i, 0, 0)),   # A_hat tile
                pl.BlockSpec((TB, N, D), lambda i: (i, 0, 0)),   # node features
                pl.BlockSpec((TB, D),    lambda i: (i, 0)),      # organism embedding rows
                pl.BlockSpec((D, H),     lambda i: (0, 0)),      # W1 (resident, no re-DMA)
                pl.BlockSpec((1, H),     lambda i: (0, 0)),      # b1
                pl.BlockSpec((H, CP),    lambda i: (0, 0)),      # W2 @ Wc[:D] (lane-padded)
                pl.BlockSpec((D, CP),    lambda i: (0, 0)),      # Wc[D:]      (lane-padded)
                pl.BlockSpec((1, CP),    lambda i: (0, 0)),      # b2 @ Wc[:D] + bc
            ],
            out_specs=pl.BlockSpec((TB, CP), lambda i: (i, 0)),
        ),
        compiler_params=pltpu.CompilerParams(
            dimension_semantics=("parallel",)),   # batch-tile axis shards across TCs
    )(adj_c, x_c, org_c, w1_c, b1, w2c_c, wco_c, ball)
    return out[:B, :C]


def _reference(adj_norm, x, org_emb, w1, b1, w2, b2, wc, bc):
    h1 = jnp.maximum(jnp.einsum('bnm,bmd->bnd', adj_norm, x @ w1) + b1, 0.0)
    h2 = jnp.einsum('bnm,bmd->bnd', adj_norm, h1 @ w2) + b2
    pooled = jnp.mean(h2, axis=1)                     # (B, D)
    feat = jnp.concatenate([pooled, org_emb], axis=1)
    return feat @ wc + bc


if __name__ == "__main__":
    B, N, D, H = 2, 8, 32, 64          # batch, nodes, d_model, d_hidden
    NUM_ORGS, NUM_CLASS = 4, 8

    key = jax.random.PRNGKey(0)
    k_x, k_a, k_w1, k_w2, k_wc, k_emb, k_org = jax.random.split(key, 7)

    # Node features and a random symmetric graph with self-loops,
    # symmetric normalization A_hat = D^{-1/2} (A + I) D^{-1/2} (DGL GraphConv norm).
    x = jax.random.normal(k_x, (B, N, D), dtype=jnp.float32)
    a_rand = (jax.random.uniform(k_a, (B, N, N)) > 0.5).astype(jnp.float32)
    a = jnp.maximum(a_rand, jnp.swapaxes(a_rand, 1, 2))
    a = a + jnp.eye(N, dtype=jnp.float32)[None]
    deg = jnp.sum(a, axis=-1)
    d_inv_sqrt = 1.0 / jnp.sqrt(deg)
    adj_norm = a * d_inv_sqrt[:, :, None] * d_inv_sqrt[:, None, :]

    # Deterministic parameters (synthetic init; shapes follow the module config).
    w1 = jax.random.normal(k_w1, (D, H), dtype=jnp.float32) * 0.1
    b1 = jnp.zeros((1, H), dtype=jnp.float32)
    w2 = jax.random.normal(k_w2, (H, D), dtype=jnp.float32) * 0.1
    b2 = jnp.zeros((1, D), dtype=jnp.float32)
    wc = jax.random.normal(k_wc, (2 * D, NUM_CLASS), dtype=jnp.float32) * 0.1
    bc = jnp.zeros((1, NUM_CLASS), dtype=jnp.float32)
    emb_table = jax.random.normal(k_emb, (NUM_ORGS, D), dtype=jnp.float32)

    # OrganismEmbedding: id -> row gather done as JAX glue outside the kernel.
    org = jax.random.randint(k_org, (B,), 0, NUM_ORGS)
    org_emb = emb_table[org]                                              # (B, D)

    ref = _reference(adj_norm, x, org_emb, w1, b1, w2, b2, wc, bc)

    # f32 path (exact up to fp reassociation, all generations)
    out = graphconv_organism_classifier(adj_norm, x, org_emb, w1, b1, w2, b2, wc, bc)
    out = jax.block_until_ready(out)
    assert out.shape == (B, NUM_CLASS)
    assert jnp.allclose(out, ref, atol=1e-4, rtol=1e-4), "f32 kernel mismatch vs reference"

    # bf16 MXU-operand path (v6e/v7x fast path; f32 accumulation keeps it close)
    out_bf16 = graphconv_organism_classifier(adj_norm, x, org_emb, w1, b1, w2, b2, wc, bc,
                                             compute_dtype=jnp.bfloat16)
    out_bf16 = jax.block_until_ready(out_bf16)
    assert jnp.allclose(out_bf16, ref, atol=1e-1, rtol=1e-1), "bf16 kernel mismatch vs reference"

    print("KERNEL_OK")
</pallas_src>

<mosaic_0001>
module attributes {stable_mosaic.version = 11 : i64} {
  func.func @gconv_classifier_kernel(%arg0: i32, %arg1: memref<2x8x8xf32, #tpu.memory_space<vmem>>, %arg2: memref<2x8x32xf32, #tpu.memory_space<vmem>>, %arg3: memref<2x32xf32, #tpu.memory_space<vmem>>, %arg4: memref<32x64xf32, #tpu.memory_space<vmem>>, %arg5: memref<1x64xf32, #tpu.memory_space<vmem>>, %arg6: memref<64x128xf32, #tpu.memory_space<vmem>>, %arg7: memref<32x128xf32, #tpu.memory_space<vmem>>, %arg8: memref<1x128xf32, #tpu.memory_space<vmem>>, %arg9: memref<2x128xf32, #tpu.memory_space<vmem>>) attributes {dimension_semantics = [#tpu.dimension_semantics<parallel>], iteration_bounds = array<i64: 1>, scalar_prefetch = 0 : i64, scratch_operands = 0 : i64, tpu.core_type = #tpu.core_type<tc>, window_params = [{transform_indices = @transform_0, window_bounds = array<i64: 2, 8, 8>}, {transform_indices = @transform_1, window_bounds = array<i64: 2, 8, 32>}, {transform_indices = @transform_2, window_bounds = array<i64: 2, 32>}, {pipeline_mode = #tpu.pipeline_mode<synchronous>, transform_indices = @transform_3, window_bounds = array<i64: 32, 64>}, {pipeline_mode = #tpu.pipeline_mode<synchronous>, transform_indices = @transform_4, window_bounds = array<i64: 1, 64>}, {pipeline_mode = #tpu.pipeline_mode<synchronous>, transform_indices = @transform_5, window_bounds = array<i64: 64, 128>}, {pipeline_mode = #tpu.pipeline_mode<synchronous>, transform_indices = @transform_6, window_bounds = array<i64: 32, 128>}, {pipeline_mode = #tpu.pipeline_mode<synchronous>, transform_indices = @transform_7, window_bounds = array<i64: 1, 128>}, {transform_indices = @transform_8, window_bounds = array<i64: 2, 128>}]} {
    %c0 = arith.constant 0 : index
    %c0_0 = arith.constant 0 : index
    %c0_1 = arith.constant 0 : index
    %0 = vector.load %arg1[%c0, %c0_0, %c0_1] : memref<2x8x8xf32, #tpu.memory_space<vmem>>, vector<2x8x8xf32>
    %c0_2 = arith.constant 0 : index
    %c0_3 = arith.constant 0 : index
    %c0_4 = arith.constant 0 : index
    %1 = vector.load %arg2[%c0_2, %c0_3, %c0_4] : memref<2x8x32xf32, #tpu.memory_space<vmem>>, vector<2x8x32xf32>
    "tpu.trace_start"() <{level = 10 : i32, message = "bnm,bmd->bnd"}> : () -> ()
    %cst = arith.constant dense<0.000000e+00> : vector<2x8x32xf32>
    %2 = tpu.matmul %0, %1, %cst {dimension_numbers = #tpu.dot_dimension_numbers<[2], [1], [1], [2], [0, 0, 0, 1, 1, 2], [0], [0]>} : vector<2x8x8xf32>, vector<2x8x32xf32>, vector<2x8x32xf32> -> vector<2x8x32xf32>
    "tpu.trace_stop"() : () -> ()
    %3 = vector.shape_cast %2 : vector<2x8x32xf32> to vector<16x32xf32>
    %c0_5 = arith.constant 0 : index
    %c0_6 = arith.constant 0 : index
    %4 = vector.load %arg4[%c0_5, %c0_6] : memref<32x64xf32, #tpu.memory_space<vmem>>, vector<32x64xf32>
    %cst_7 = arith.constant dense<0.000000e+00> : vector<16x64xf32>
    %5 = tpu.matmul %3, %4, %cst_7 {dimension_numbers = #tpu.dot_dimension_numbers<[1], [0], [0], [1], [0, 0, 1, 1], [], []>} : vector<16x32xf32>, vector<32x64xf32>, vector<16x64xf32> -> vector<16x64xf32>
    %c0_8 = arith.constant 0 : index
    %c0_9 = arith.constant 0 : index
    %6 = vector.load %arg5[%c0_8, %c0_9] : memref<1x64xf32, #tpu.memory_space<vmem>>, vector<1x64xf32>
    %7 = vector.broadcast %6 : vector<1x64xf32> to vector<16x64xf32>
    %8 = arith.addf %5, %7 : vector<16x64xf32>
    %cst_10 = arith.constant 0.000000e+00 : f32
    %9 = vector.broadcast %cst_10 : f32 to vector<16x64xf32>
    %10 = arith.maximumf %8, %9 : vector<16x64xf32>
    %cst_11 = arith.constant dense<0.000000e+00> : vector<2x8xf32>
    %11 = vector.multi_reduction <add>, %0, %cst_11 [1] : vector<2x8x8xf32> to vector<2x8xf32>
    %12 = vector.shape_cast %11 : vector<2x8xf32> to vector<2x1x8xf32>
    %cst_12 = arith.constant 8.000000e+00 : f32
    %13 = vector.broadcast %cst_12 : f32 to vector<2x1x8xf32>
    %14 = arith.divf %12, %13 : vector<2x1x8xf32>
    %15 = vector.shape_cast %10 : vector<16x64xf32> to vector<2x8x64xf32>
    "tpu.trace_start"() <{level = 10 : i32, message = "bon,bnh->boh"}> : () -> ()
    %cst_13 = arith.constant dense<0.000000e+00> : vector<2x1x64xf32>
    %16 = tpu.matmul %14, %15, %cst_13 {dimension_numbers = #tpu.dot_dimension_numbers<[2], [1], [1], [2], [0, 0, 0, 1, 1, 2], [0], [0]>} : vector<2x1x8xf32>, vector<2x8x64xf32>, vector<2x1x64xf32> -> vector<2x1x64xf32>
    "tpu.trace_stop"() : () -> ()
    %17 = vector.shape_cast %16 : vector<2x1x64xf32> to vector<2x64xf32>
    %c0_14 = arith.constant 0 : index
    %c0_15 = arith.constant 0 : index
    %18 = vector.load %arg6[%c0_14, %c0_15] : memref<64x128xf32, #tpu.memory_space<vmem>>, vector<64x128xf32>
    %cst_16 = arith.constant dense<0.000000e+00> : vector<2x128xf32>
    %19 = tpu.matmul %17, %18, %cst_16 {dimension_numbers = #tpu.dot_dimension_numbers<[1], [0], [0], [1], [0, 0, 1, 1], [], []>} : vector<2x64xf32>, vector<64x128xf32>, vector<2x128xf32> -> vector<2x128xf32>
    %c0_17 = arith.constant 0 : index
    %c0_18 = arith.constant 0 : index
    %20 = vector.load %arg3[%c0_17, %c0_18] : memref<2x32xf32, #tpu.memory_space<vmem>>, vector<2x32xf32>
    %c0_19 = arith.constant 0 : index
    %c0_20 = arith.constant 0 : index
    %21 = vector.load %arg7[%c0_19, %c0_20] : memref<32x128xf32, #tpu.memory_space<vmem>>, vector<32x128xf32>
    %cst_21 = arith.constant dense<0.000000e+00> : vector<2x128xf32>
    %22 = tpu.matmul %20, %21, %cst_21 {dimension_numbers = #tpu.dot_dimension_numbers<[1], [0], [0], [1], [0, 0, 1, 1], [], []>} : vector<2x32xf32>, vector<32x128xf32>, vector<2x128xf32> -> vector<2x128xf32>
    %23 = arith.addf %19, %22 : vector<2x128xf32>
    %c0_22 = arith.constant 0 : index
    %c0_23 = arith.constant 0 : index
    %24 = vector.load %arg8[%c0_22, %c0_23] : memref<1x128xf32, #tpu.memory_space<vmem>>, vector<1x128xf32>
    %25 = vector.broadcast %24 : vector<1x128xf32> to vector<2x128xf32>
    %26 = arith.addf %23, %25 : vector<2x128xf32>
    %c0_24 = arith.constant 0 : index
    %c0_25 = arith.constant 0 : index
    %27 = vector.load %arg9[%c0_24, %c0_25] : memref<2x128xf32, #tpu.memory_space<vmem>>, vector<2x128xf32>
    tpu.vector_store %arg9[%c0_24, %c0_25], %26 {strides = array<i32>} : memref<2x128xf32, #tpu.memory_space<vmem>>, vector<2x128xf32>,
    return
  }
  func.func @transform_0(%arg0: i32) -> (i32, i32, i32) {
    %c0_i32 = arith.constant 0 : i32
    %c0_i32_0 = arith.constant 0 : i32
    %c0_i32_1 = arith.constant 0 : i32
    return %arg0, %c0_i32, %c0_i32_0 : i32, i32, i32
  }
  func.func @transform_1(%arg0: i32) -> (i32, i32, i32) {
    %c0_i32 = arith.constant 0 : i32
    %c0_i32_0 = arith.constant 0 : i32
    %c0_i32_1 = arith.constant 0 : i32
    return %arg0, %c0_i32, %c0_i32_0 : i32, i32, i32
  }
  func.func @transform_2(%arg0: i32) -> (i32, i32) {
    %c0_i32 = arith.constant 0 : i32
    %c0_i32_0 = arith.constant 0 : i32
    return %arg0, %c0_i32 : i32, i32
  }
  func.func @transform_3(%arg0: i32) -> (i32, i32) {
    %c0_i32 = arith.constant 0 : i32
    %c0_i32_0 = arith.constant 0 : i32
    %c0_i32_1 = arith.constant 0 : i32
    return %c0_i32, %c0_i32_0 : i32, i32
  }
  func.func @transform_4(%arg0: i32) -> (i32, i32) {
    %c0_i32 = arith.constant 0 : i32
    %c0_i32_0 = arith.constant 0 : i32
    %c0_i32_1 = arith.constant 0 : i32
    return %c0_i32, %c0_i32_0 : i32, i32
  }
  func.func @transform_5(%arg0: i32) -> (i32, i32) {
    %c0_i32 = arith.constant 0 : i32
    %c0_i32_0 = arith.constant 0 : i32
    %c0_i32_1 = arith.constant 0 : i32
    return %c0_i32, %c0_i32_0 : i32, i32
  }
  func.func @transform_6(%arg0: i32) -> (i32, i32) {
    %c0_i32 = arith.constant 0 : i32
    %c0_i32_0 = arith.constant 0 : i32
    %c0_i32_1 = arith.constant 0 : i32
    return %c0_i32, %c0_i32_0 : i32, i32
  }
  func.func @transform_7(%arg0: i32) -> (i32, i32) {
    %c0_i32 = arith.constant 0 : i32
    %c0_i32_0 = arith.constant 0 : i32
    %c0_i32_1 = arith.constant 0 : i32
    return %c0_i32, %c0_i32_0 : i32, i32
  }
  func.func @transform_8(%arg0: i32) -> (i32, i32) {
    %c0_i32 = arith.constant 0 : i32
    %c0_i32_0 = arith.constant 0 : i32
    return %arg0, %c0_i32 : i32, i32
  }
}

</mosaic_0001>

<llo_original>
// kernel: tpu_custom_call.1
$region0: #{tpu_custom_call.1}
  #allocation0 [shape = 'u32[]', space=smem, size = 0x4, offset = 0x4, fixed_abs, tag = 'smem constant byte address 0x4 - core index']
  #allocation1 [shape = 'u32[144,128]{1,0:T(1,128)}', space=vmem, size = 0x12000, scoped, tag = 'internal scratch']
  %s0 = inlined_call_operand.hbm [shape: f32[2,8,8], index: 0, kind: input, shape index: {}]
  %s1 = inlined_call_operand.hbm [shape: f32[2,8,32], index: 1, kind: input, shape index: {}]
  %s2 = inlined_call_operand.vmem [shape: f32[2,32], index: 2, kind: input, shape index: {}]
  %s3 = inlined_call_operand.hbm [shape: f32[32,64], index: 3, kind: input, shape index: {}]
  %s4 = inlined_call_operand.vmem [shape: f32[1,64], index: 4, kind: input, shape index: {}]
  %s5 = inlined_call_operand.hbm [shape: f32[64,128], index: 5, kind: input, shape index: {}]
  %s6 = inlined_call_operand.hbm [shape: f32[32,128], index: 6, kind: input, shape index: {}]
  %s7 = inlined_call_operand.vmem [shape: f32[1,128], index: 7, kind: input, shape index: {}]
  %s8 = inlined_call_operand.hbm [shape: f32[2,128], index: 8, kind: output, shape index: {}]
  %s9 = sld [smem:[#allocation0]]
  $region62: #{tpu_custom_call.1} parent=0
    _
  %s11 = ssub.s32 1, %s9
  %s12 = scalar_select 0, %s11, %s9
  $region1: #{tpu_custom_call.1} parent=0
    #allocation2 [shape = 'u8[8192]{0}', space=vmem, size = 0x2000, scoped, tag = 'input window, operand 0, single buffered']
    #allocation3 [shape = 's32[1]{0}', space=sflag, size = 0x4, scoped, tag = 'scoped memory for tpu_custom_call.1']
    #allocation4 [shape = 's32[1]{0}', space=sflag, size = 0x4, scoped, tag = 'scoped memory for tpu_custom_call.1']
    #allocation5 [shape = 'u8[8192]{0}', space=vmem, size = 0x2000, scoped, tag = 'input window, operand 1, single buffered']
    #allocation6 [shape = 's32[1]{0}', space=sflag, size = 0x4, scoped, tag = 'scoped memory for tpu_custom_call.1']
    #allocation7 [shape = 'u8[16384]{0}', space=vmem, size = 0x4000, scoped, tag = 'input window, operand 3, single buffered']
    #allocation8 [shape = 'u8[32768]{0}', space=vmem, size = 0x8000, scoped, tag = 'input window, operand 5, single buffered']
    #allocation9 [shape = 's32[1]{0}', space=sflag, size = 0x4, scoped, tag = 'scoped memory for tpu_custom_call.1']
    #allocation10 [shape = 'u8[16384]{0}', space=vmem, size = 0x4000, scoped, tag = 'input window, operand 6, single buffered']
    #allocation11 [shape = 'u8[1024]{0}', space=vmem, size = 0x400, scoped, tag = 'output window, operand 0, single buffered']
    %13 = vsyncpa [#allocation3], 0
    %14 = vsyncpa [#allocation6], 0
    %15 = vsyncpa [#allocation9], 0
    %16 = vsyncpa [#allocation4], 0
    // Predicated region
    $region2: #{tpu_custom_call.1} parent=1 // pred_check
      _
    $region3: #{tpu_custom_call.1} parent=1 // pred_check_branch
      %18 = sbr.rel (0) target = $region5
    $region4: #{tpu_custom_call.1} parent=1 // pred_region
      %s20 = ssub.s32 256, 256
      %21 = vsyncadd [#allocation3], %s20
      %s22 = sshll.u32 [#allocation2], 4
      %s23 = int_to_ptr.vmem [resolvable:$true] %s22
      %28 = dma.hbm_to_vmem [thread:$0]  %s0, 256, %s23, [#allocation3], 128, 128, 8
    $region5: #{tpu_custom_call.1} parent=1 // pred_fallthru
      _
    // Predicated region
    $region6: #{tpu_custom_call.1} parent=1 // pred_check
      _
    $region7: #{tpu_custom_call.1} parent=1 // pred_check_branch
      %30 = sbr.rel (0) target = $region9
    $region8: #{tpu_custom_call.1} parent=1 // pred_region
      %s32 = ssub.s32 256, 256
      %33 = vsyncadd [#allocation6], %s32
      %s34 = sshll.u32 [#allocation5], 4
      %s35 = int_to_ptr.vmem [resolvable:$true] %s34
      %40 = dma.hbm_to_vmem [thread:$0]  %s1, 256, %s35, [#allocation6], 128, 128, 8
    $region9: #{tpu_custom_call.1} parent=1 // pred_fallthru
      _
    // Predicated region
    $region10: #{tpu_custom_call.1} parent=1 // pred_check
      _
    $region11: #{tpu_custom_call.1} parent=1 // pred_check_branch
      %42 = sbr.rel (0) target = $region13
    $region12: #{tpu_custom_call.1} parent=1 // pred_region
      _
    $region13: #{tpu_custom_call.1} parent=1 // pred_fallthru
      _
    // Predicated region
    $region14: #{tpu_custom_call.1} parent=1 // pred_check
      _
    $region15: #{tpu_custom_call.1} parent=1 // pred_check_branch
      %44 = sbr.rel (0) target = $region17
    $region16: #{tpu_custom_call.1} parent=1 // pred_region
      %s46 = ssub.s32 512, 512
      %47 = vsyncadd [#allocation6], %s46
      %s48 = sshll.u32 [#allocation7], 4
      %s49 = int_to_ptr.vmem [resolvable:$true] %s48
      %54 = dma.hbm_to_vmem [thread:$0]  %s3, 512, %s49, [#allocation6], 128, 128, 8
    $region17: #{tpu_custom_call.1} parent=1 // pred_fallthru
      _
    // Predicated region
    $region18: #{tpu_custom_call.1} parent=1 // pred_check
      _
    $region19: #{tpu_custom_call.1} parent=1 // pred_check_branch
      %56 = sbr.rel (0) target = $region21
    $region20: #{tpu_custom_call.1} parent=1 // pred_region
      _
    $region21: #{tpu_custom_call.1} parent=1 // pred_fallthru
      _
    // Predicated region
    $region22: #{tpu_custom_call.1} parent=1 // pred_check
      _
    $region23: #{tpu_custom_call.1} parent=1 // pred_check_branch
      %58 = sbr.rel (0) target = $region25
    $region24: #{tpu_custom_call.1} parent=1 // pred_region
      %s60 = ssub.s32 1024, 1024
      %61 = vsyncadd [#allocation9], %s60
      %s62 = sshll.u32 [#allocation8], 4
      %s63 = int_to_ptr.vmem [resolvable:$true] %s62
      %68 = dma.hbm_to_vmem [thread:$0]  %s5, 1024, %s63, [#allocation9], 128, 128, 8
    $region25: #{tpu_custom_call.1} parent=1 // pred_fallthru
      _
    // Predicated region
    $region26: #{tpu_custom_call.1} parent=1 // pred_check
      _
    $region27: #{tpu_custom_call.1} parent=1 // pred_check_branch
      %70 = sbr.rel (0) target = $region29
    $region28: #{tpu_custom_call.1} parent=1 // pred_region
      %s72 = ssub.s32 512, 512
      %73 = vsyncadd [#allocation9], %s72
      %s74 = sshll.u32 [#allocation10], 4
      %s75 = int_to_ptr.vmem [resolvable:$true] %s74
      %80 = dma.hbm_to_vmem [thread:$0]  %s6, 512, %s75, [#allocation9], 128, 128, 8
    $region29: #{tpu_custom_call.1} parent=1 // pred_fallthru
      _
    // Predicated region
    $region30: #{tpu_custom_call.1} parent=1 // pred_check
      _
    $region31: #{tpu_custom_call.1} parent=1 // pred_check_branch
      %82 = sbr.rel (0) target = $region33
    $region32: #{tpu_custom_call.1} parent=1 // pred_region
      _
    $region33: #{tpu_custom_call.1} parent=1 // pred_fallthru
      _
    // Predicated region
    $region34: #{tpu_custom_call.1} parent=1 // pred_check
      _
    $region35: #{tpu_custom_call.1} parent=1 // pred_check_branch
      %84 = sbr.rel (0) target = $region37
    $region36: #{tpu_custom_call.1} parent=1 // pred_region
      %85 = dma.done [#allocation3], 256
    $region37: #{tpu_custom_call.1} parent=1 // pred_fallthru
      _
    // Predicated region
    $region38: #{tpu_custom_call.1} parent=1 // pred_check
      _
    $region39: #{tpu_custom_call.1} parent=1 // pred_check_branch
      %87 = sbr.rel (0) target = $region41
    $region40: #{tpu_custom_call.1} parent=1 // pred_region
      %88 = dma.done [#allocation6], 256
    $region41: #{tpu_custom_call.1} parent=1 // pred_fallthru
      _
    // Predicated region
    $region42: #{tpu_custom_call.1} parent=1 // pred_check
      _
    $region43: #{tpu_custom_call.1} parent=1 // pred_check_branch
      %90 = sbr.rel (0) target = $region45
    $region44: #{tpu_custom_call.1} parent=1 // pred_region
      %91 = dma.done [#allocation6], 512
    $region45: #{tpu_custom_call.1} parent=1 // pred_fallthru
      _
    // Predicated region
    $region46: #{tpu_custom_call.1} parent=1 // pred_check
      _
    $region47: #{tpu_custom_call.1} parent=1 // pred_check_branch
      %93 = sbr.rel (0) target = $region49
    $region48: #{tpu_custom_call.1} parent=1 // pred_region
      %94 = dma.done [#allocation9], 1024
    $region49: #{tpu_custom_call.1} parent=1 // pred_fallthru
      _
    // Predicated region
    $region50: #{tpu_custom_call.1} parent=1 // pred_check
      _
    $region51: #{tpu_custom_call.1} parent=1 // pred_check_branch
      %96 = sbr.rel (0) target = $region53
    $region52: #{tpu_custom_call.1} parent=1 // pred_region
      %97 = dma.done [#allocation9], 512
    $region53: #{tpu_custom_call.1} parent=1 // pred_fallthru
      _
    %v98 = vld [vmem:[#allocation2] sm:$0xff]
    %v99 = vld [vmem:[#allocation2 + $0x8] sm:$0xff]
    %v100 = vld [vmem:[#allocation5] sm:$0xff]
    %v101 = vld [vmem:[#allocation5 + $0x8] sm:$0xff]
    %vm102 = vcmask 64512
    %v104 = vsel %vm102, %v98, 0
    %106 = vmatprep.subr.mxu0 0.0
    %107 = vmatpush1.msra.mxu0 %v100
    %108 = vmatprep.subr.mxu0 0.0
    %109 = vmatpush1.msra.mxu0 0.0
    %110 = vmatprep.subr.mxu0 0.0
    %111 = vmatpush1.msra.mxu0 0.0
    %112 = vmatprep.subr.mxu0 0.0
    %113 = vmatpush1.msra.mxu0 0.0
    %114 = vmatprep.subr.mxu0 0.0
    %115 = vmatpush1.msra.mxu0 0.0
    %116 = vmatprep.subr.mxu0 0.0
    %117 = vmatpush1.msra.mxu0 0.0
    %118 = vmatprep.subr.mxu0 0.0
    %119 = vmatpush1.msra.mxu0 0.0
    %120 = vmatprep.subr.mxu0 0.0
    %121 = vmatpush1.msra.mxu0 0.0
    %122 = vmatprep.subr.mxu0 0.0
    %123 = vmatpush1.msra.mxu0 0.0
    %124 = vmatprep.subr.mxu0 0.0
    %125 = vmatpush1.msra.mxu0 0.0
    %126 = vmatprep.subr.mxu0 0.0
    %127 = vmatpush1.msra.mxu0 0.0
    %128 = vmatprep.subr.mxu0 0.0
    %129 = vmatpush1.msra.mxu0 0.0
    %130 = vmatprep.subr.mxu0 0.0
    %131 = vmatpush1.msra.mxu0 0.0
    %132 = vmatprep.subr.mxu0 0.0
    %133 = vmatpush1.msra.mxu0 0.0
    %134 = vmatprep.subr.mxu0 0.0
    %135 = vmatpush1.msra.mxu0 0.0
    %136 = vmatprep.subr.mxu0 0.0
    %137 = vmatpush1.msra.mxu0 0.0
    %138 = vmatprep.subr.mxu0 0.0
    %139 = vmatpush1.msra.mxu0 0.0
    %140 = vmatprep.subr.mxu0 0.0
    %141 = vmatpush1.msra.mxu0 0.0
    %142 = vmatprep.subr.mxu0 0.0
    %143 = vmatpush1.msra.mxu0 0.0
    %144 = vmatprep.subr.mxu0 0.0
    %145 = vmatpush1.msra.mxu0 0.0
    %146 = vmatprep.subr.mxu0 0.0
    %147 = vmatpush1.msra.mxu0 0.0
    %148 = vmatprep.subr.mxu0 0.0
    %149 = vmatpush1.msra.mxu0 0.0
    %150 = vmatprep.subr.mxu0 0.0
    %151 = vmatpush1.msra.mxu0 0.0
    %152 = vmatprep.subr.mxu0 0.0
    %153 = vmatpush1.msra.mxu0 0.0
    %154 = vmatprep.subr.mxu0 0.0
    %155 = vmatpush1.msra.mxu0 0.0
    %156 = vmatprep.subr.mxu0 0.0
    %157 = vmatpush1.msra.mxu0 0.0
    %158 = vmatprep.subr.mxu0 0.0
    %159 = vmatpush1.msra.mxu0 0.0
    %160 = vmatprep.subr.mxu0 0.0
    %161 = vmatpush1.msra.mxu0 0.0
    %162 = vmatprep.subr.mxu0 0.0
    %163 = vmatpush1.msra.mxu0 0.0
    %164 = vmatprep.subr.mxu0 0.0
    %165 = vmatpush1.msra.mxu0 0.0
    %166 = vmatprep.subr.mxu0 0.0
    %167 = vmatpush1.msra.mxu0 0.0
    %168 = vmatprep.subr.mxu0 0.0
    %169 = vmatpush1.msra.mxu0 0.0
    %170 = vmatprep.mubr.f32.mxu0 0.0
    %171 = vmatmul.mubr.f32.gmra.mrb[0].mxu0 %v104
    %v172 = vpop.f32.mrb[0].mxu0
    %v173 = vadd.f32 0.0, %v172
    %v174 = vpop.f32.mrb[0].mxu0
    %175 = vdwg.mxu0
    %v177 = vsel %vm102, %v99, 0
    %179 = vmatprep.subr.mxu0 0.0
    %180 = vmatpush1.msra.mxu0 %v101
    %181 = vmatprep.subr.mxu0 0.0
    %182 = vmatpush1.msra.mxu0 0.0
    %183 = vmatprep.subr.mxu0 0.0
    %184 = vmatpush1.msra.mxu0 0.0
    %185 = vmatprep.subr.mxu0 0.0
    %186 = vmatpush1.msra.mxu0 0.0
    %187 = vmatprep.subr.mxu0 0.0
    %188 = vmatpush1.msra.mxu0 0.0
    %189 = vmatprep.subr.mxu0 0.0
    %190 = vmatpush1.msra.mxu0 0.0
    %191 = vmatprep.subr.mxu0 0.0
    %192 = vmatpush1.msra.mxu0 0.0
    %193 = vmatprep.subr.mxu0 0.0
    %194 = vmatpush1.msra.mxu0 0.0
    %195 = vmatprep.subr.mxu0 0.0
    %196 = vmatpush1.msra.mxu0 0.0
    %197 = vmatprep.subr.mxu0 0.0
    %198 = vmatpush1.msra.mxu0 0.0
    %199 = vmatprep.subr.mxu0 0.0
    %200 = vmatpush1.msra.mxu0 0.0
    %201 = vmatprep.subr.mxu0 0.0
    %202 = vmatpush1.msra.mxu0 0.0
    %203 = vmatprep.subr.mxu0 0.0
    %204 = vmatpush1.msra.mxu0 0.0
    %205 = vmatprep.subr.mxu0 0.0
    %206 = vmatpush1.msra.mxu0 0.0
    %207 = vmatprep.subr.mxu0 0.0
    %208 = vmatpush1.msra.mxu0 0.0
    %209 = vmatprep.subr.mxu0 0.0
    %210 = vmatpush1.msra.mxu0 0.0
    %211 = vmatprep.subr.mxu0 0.0
    %212 = vmatpush1.msra.mxu0 0.0
    %213 = vmatprep.subr.mxu0 0.0
    %214 = vmatpush1.msra.mxu0 0.0
    %215 = vmatprep.subr.mxu0 0.0
    %216 = vmatpush1.msra.mxu0 0.0
    %217 = vmatprep.subr.mxu0 0.0
    %218 = vmatpush1.msra.mxu0 0.0
    %219 = vmatprep.subr.mxu0 0.0
    %220 = vmatpush1.msra.mxu0 0.0
    %221 = vmatprep.subr.mxu0 0.0
    %222 = vmatpush1.msra.mxu0 0.0
    %223 = vmatprep.subr.mxu0 0.0
    %224 = vmatpush1.msra.mxu0 0.0
    %225 = vmatprep.subr.mxu0 0.0
    %226 = vmatpush1.msra.mxu0 0.0
    %227 = vmatprep.subr.mxu0 0.0
    %228 = vmatpush1.msra.mxu0 0.0
    %229 = vmatprep.subr.mxu0 0.0
    %230 = vmatpush1.msra.mxu0 0.0
    %231 = vmatprep.subr.mxu0 0.0
    %232 = vmatpush1.msra.mxu0 0.0
    %233 = vmatprep.subr.mxu0 0.0
    %234 = vmatpush1.msra.mxu0 0.0
    %235 = vmatprep.subr.mxu0 0.0
    %236 = vmatpush1.msra.mxu0 0.0
    %237 = vmatprep.subr.mxu0 0.0
    %238 = vmatpush1.msra.mxu0 0.0
    %239 = vmatprep.subr.mxu0 0.0
    %240 = vmatpush1.msra.mxu0 0.0
    %241 = vmatprep.subr.mxu0 0.0
    %242 = vmatpush1.msra.mxu0 0.0
    %243 = vmatprep.mubr.f32.mxu0 0.0
    %244 = vmatmul.mubr.f32.gmra.mrb[0].mxu0 %v177
    %v245 = vpop.f32.mrb[0].mxu0
    %v246 = vadd.f32 0.0, %v245
    %v247 = vpop.f32.mrb[0].mxu0
    %248 = vdwg.mxu0
    %v249 = vld [vmem:[#allocation7] sm:$0xff]
    %v250 = vld [vmem:[#allocation7 + $0x8] sm:$0xff]
    %v251 = vld [vmem:[#allocation7 + $0x10] sm:$0xff]
    %v252 = vld [vmem:[#allocation7 + $0x18] sm:$0xff]
    %v253 = vld [vmem:[%s4] sm:$0x1]
    %v255 = vlaneseq
    %v256 = vshrl.u32 %v255, 7
    %v257 = vsub.s32 0, %v256
    %v258 = vrot.slane %v253, %v257
    %vm260 = vcmask 261120
    %v262 = vsel %vm260, %v173, 0
    %v265 = vsel %vm260, %v246, 0
    %267 = vmatprep.subr.mxu0 0.0
    %268 = vmatpush1.msra.mxu0 %v249
    %269 = vmatprep.subr.mxu0 0.0
    %270 = vmatpush1.msra.mxu0 %v250
    %271 = vmatprep.subr.mxu0 0.0
    %272 = vmatpush1.msra.mxu0 %v251
    %273 = vmatprep.subr.mxu0 0.0
    %274 = vmatpush1.msra.mxu0 %v252
    %275 = vmatprep.subr.mxu0 0.0
    %276 = vmatpush1.msra.mxu0 0.0
    %277 = vmatprep.subr.mxu0 0.0
    %278 = vmatpush1.msra.mxu0 0.0
    %279 = vmatprep.subr.mxu0 0.0
    %280 = vmatpush1.msra.mxu0 0.0
    %281 = vmatprep.subr.mxu0 0.0
    %282 = vmatpush1.msra.mxu0 0.0
    %283 = vmatprep.subr.mxu0 0.0
    %284 = vmatpush1.msra.mxu0 0.0
    %285 = vmatprep.subr.mxu0 0.0
    %286 = vmatpush1.msra.mxu0 0.0
    %287 = vmatprep.subr.mxu0 0.0
    %288 = vmatpush1.msra.mxu0 0.0
    %289 = vmatprep.subr.mxu0 0.0
    %290 = vmatpush1.msra.mxu0 0.0
    %291 = vmatprep.subr.mxu0 0.0
    %292 = vmatpush1.msra.mxu0 0.0
    %293 = vmatprep.subr.mxu0 0.0
    %294 = vmatpush1.msra.mxu0 0.0
    %295 = vmatprep.subr.mxu0 0.0
    %296 = vmatpush1.msra.mxu0 0.0
    %297 = vmatprep.subr.mxu0 0.0
    %298 = vmatpush1.msra.mxu0 0.0
    %299 = vmatprep.subr.mxu0 0.0
    %300 = vmatpush1.msra.mxu0 0.0
    %301 = vmatprep.subr.mxu0 0.0
    %302 = vmatpush1.msra.mxu0 0.0
    %303 = vmatprep.subr.mxu0 0.0
    %304 = vmatpush1.msra.mxu0 0.0
    %305 = vmatprep.subr.mxu0 0.0
    %306 = vmatpush1.msra.mxu0 0.0
    %307 = vmatprep.subr.mxu0 0.0
    %308 = vmatpush1.msra.mxu0 0.0
    %309 = vmatprep.subr.mxu0 0.0
    %310 = vmatpush1.msra.mxu0 0.0
    %311 = vmatprep.subr.mxu0 0.0
    %312 = vmatpush1.msra.mxu0 0.0
    %313 = vmatprep.subr.mxu0 0.0
    %314 = vmatpush1.msra.mxu0 0.0
    %315 = vmatprep.subr.mxu0 0.0
    %316 = vmatpush1.msra.mxu0 0.0
    %317 = vmatprep.subr.mxu0 0.0
    %318 = vmatpush1.msra.mxu0 0.0
    %319 = vmatprep.subr.mxu0 0.0
    %320 = vmatpush1.msra.mxu0 0.0
    %321 = vmatprep.subr.mxu0 0.0
    %322 = vmatpush1.msra.mxu0 0.0
    %323 = vmatprep.subr.mxu0 0.0
    %324 = vmatpush1.msra.mxu0 0.0
    %325 = vmatprep.subr.mxu0 0.0
    %326 = vmatpush1.msra.mxu0 0.0
    %327 = vmatprep.subr.mxu0 0.0
    %328 = vmatpush1.msra.mxu0 0.0
    %329 = vmatprep.subr.mxu0 0.0
    %330 = vmatpush1.msra.mxu0 0.0
    %331 = vmatprep.mubr.f32.mxu0 0.0
    %332 = vmatmul.mubr.f32.gmra.mrb[0].mxu0 %v262
    %v333 = vpop.f32.mrb[0].mxu0
    %v334 = vadd.f32 %v258, %v333
    %v335 = vpop.f32.mrb[0].mxu0
    %336 = vmatprep.mubr.f32.mxu0 0.0
    %337 = vmatmul.mubr.f32.gmra.mrb[0].mxu0 %v265
    %v338 = vpop.f32.mrb[0].mxu0
    %v339 = vadd.f32 %v258, %v338
    %v340 = vpop.f32.mrb[0].mxu0
    %341 = vdwg.mxu0
    %v342 = vmax.f32 %v334, 0.0
    %v343 = vmax.f32 %v339, 0.0
    %v344 = vsel %vm102, %v98, 0.0
    %v345 = vrot.slane %v344, 4
    %v346 = vadd.f32 %v344, %v345
    %v347 = vrot.slane %v346, 2
    %v348 = vadd.f32 %v346, %v347
    %v349 = vrot.slane %v348, 1
    %v350 = vadd.f32 %v348, %v349
    %v351 = vsel %vm102, %v99, 0.0
    %v352 = vrot.slane %v351, 4
    %v353 = vadd.f32 %v351, %v352
    %v354 = vrot.slane %v353, 2
    %v355 = vadd.f32 %v353, %v354
    %v356 = vrot.slane %v355, 1
    %v357 = vadd.f32 %v355, %v356
    %v358 = vrcp.pop 8.0
    %v359 = vmul.f32 %v350, %v358
    %v360 = vmul.f32 %v357, %v358
    %v362 = vsel %vm102, %v359, 0
    %364 = vmatprep.subr.mxu0 0.0
    %365 = vmatpush1.msra.mxu0 %v342
    %366 = vmatprep.subr.mxu0 0.0
    %367 = vmatpush1.msra.mxu0 0.0
    %368 = vmatprep.subr.mxu0 0.0
    %369 = vmatpush1.msra.mxu0 0.0
    %370 = vmatprep.subr.mxu0 0.0
    %371 = vmatpush1.msra.mxu0 0.0
    %372 = vmatprep.subr.mxu0 0.0
    %373 = vmatpush1.msra.mxu0 0.0
    %374 = vmatprep.subr.mxu0 0.0
    %375 = vmatpush1.msra.mxu0 0.0
    %376 = vmatprep.subr.mxu0 0.0
    %377 = vmatpush1.msra.mxu0 0.0
    %378 = vmatprep.subr.mxu0 0.0
    %379 = vmatpush1.msra.mxu0 0.0
    %380 = vmatprep.subr.mxu0 0.0
    %381 = vmatpush1.msra.mxu0 0.0
    %382 = vmatprep.subr.mxu0 0.0
    %383 = vmatpush1.msra.mxu0 0.0
    %384 = vmatprep.subr.mxu0 0.0
    %385 = vmatpush1.msra.mxu0 0.0
    %386 = vmatprep.subr.mxu0 0.0
    %387 = vmatpush1.msra.mxu0 0.0
    %388 = vmatprep.subr.mxu0 0.0
    %389 = vmatpush1.msra.mxu0 0.0
    %390 = vmatprep.subr.mxu0 0.0
    %391 = vmatpush1.msra.mxu0 0.0
    %392 = vmatprep.subr.mxu0 0.0
    %393 = vmatpush1.msra.mxu0 0.0
    %394 = vmatprep.subr.mxu0 0.0
    %395 = vmatpush1.msra.mxu0 0.0
    %396 = vmatprep.subr.mxu0 0.0
    %397 = vmatpush1.msra.mxu0 0.0
    %398 = vmatprep.subr.mxu0 0.0
    %399 = vmatpush1.msra.mxu0 0.0
    %400 = vmatprep.subr.mxu0 0.0
    %401 = vmatpush1.msra.mxu0 0.0
    %402 = vmatprep.subr.mxu0 0.0
    %403 = vmatpush1.msra.mxu0 0.0
    %404 = vmatprep.subr.mxu0 0.0
    %405 = vmatpush1.msra.mxu0 0.0
    %406 = vmatprep.subr.mxu0 0.0
    %407 = vmatpush1.msra.mxu0 0.0
    %408 = vmatprep.subr.mxu0 0.0
    %409 = vmatpush1.msra.mxu0 0.0
    %410 = vmatprep.subr.mxu0 0.0
    %411 = vmatpush1.msra.mxu0 0.0
    %412 = vmatprep.subr.mxu0 0.0
    %413 = vmatpush1.msra.mxu0 0.0
    %414 = vmatprep.subr.mxu0 0.0
    %415 = vmatpush1.msra.mxu0 0.0
    %416 = vmatprep.subr.mxu0 0.0
    %417 = vmatpush1.msra.mxu0 0.0
    %418 = vmatprep.subr.mxu0 0.0
    %419 = vmatpush1.msra.mxu0 0.0
    %420 = vmatprep.subr.mxu0 0.0
    %421 = vmatpush1.msra.mxu0 0.0
    %422 = vmatprep.subr.mxu0 0.0
    %423 = vmatpush1.msra.mxu0 0.0
    %424 = vmatprep.subr.mxu0 0.0
    %425 = vmatpush1.msra.mxu0 0.0
    %426 = vmatprep.subr.mxu0 0.0
    %427 = vmatpush1.msra.mxu0 0.0
    %428 = vmatprep.mubr.f32.mxu0 0.0
    %429 = vmatmul.mubr.f32.gmra.mrb[0].mxu0 %v362
    %v430 = vpop.f32.mrb[0].mxu0
    %v431 = vadd.f32 0.0, %v430
    %v432 = vpop.f32.mrb[0].mxu0
    %433 = vdwg.mxu0
    %v435 = vsel %vm102, %v360, 0
    %437 = vmatprep.subr.mxu0 0.0
    %438 = vmatpush1.msra.mxu0 %v343
    %439 = vmatprep.subr.mxu0 0.0
    %440 = vmatpush1.msra.mxu0 0.0
    %441 = vmatprep.subr.mxu0 0.0
    %442 = vmatpush1.msra.mxu0 0.0
    %443 = vmatprep.subr.mxu0 0.0
    %444 = vmatpush1.msra.mxu0 0.0
    %445 = vmatprep.subr.mxu0 0.0
    %446 = vmatpush1.msra.mxu0 0.0
    %447 = vmatprep.subr.mxu0 0.0
    %448 = vmatpush1.msra.mxu0 0.0
    %449 = vmatprep.subr.mxu0 0.0
    %450 = vmatpush1.msra.mxu0 0.0
    %451 = vmatprep.subr.mxu0 0.0
    %452 = vmatpush1.msra.mxu0 0.0
    %453 = vmatprep.subr.mxu0 0.0
    %454 = vmatpush1.msra.mxu0 0.0
    %455 = vmatprep.subr.mxu0 0.0
    %456 = vmatpush1.msra.mxu0 0.0
    %457 = vmatprep.subr.mxu0 0.0
    %458 = vmatpush1.msra.mxu0 0.0
    %459 = vmatprep.subr.mxu0 0.0
    %460 = vmatpush1.msra.mxu0 0.0
    %461 = vmatprep.subr.mxu0 0.0
    %462 = vmatpush1.msra.mxu0 0.0
    %463 = vmatprep.subr.mxu0 0.0
    %464 = vmatpush1.msra.mxu0 0.0
    %465 = vmatprep.subr.mxu0 0.0
    %466 = vmatpush1.msra.mxu0 0.0
    %467 = vmatprep.subr.mxu0 0.0
    %468 = vmatpush1.msra.mxu0 0.0
    %469 = vmatprep.subr.mxu0 0.0
    %470 = vmatpush1.msra.mxu0 0.0
    %471 = vmatprep.subr.mxu0 0.0
    %472 = vmatpush1.msra.mxu0 0.0
    %473 = vmatprep.subr.mxu0 0.0
    %474 = vmatpush1.msra.mxu0 0.0
    %475 = vmatprep.subr.mxu0 0.0
    %476 = vmatpush1.msra.mxu0 0.0
    %477 = vmatprep.subr.mxu0 0.0
    %478 = vmatpush1.msra.mxu0 0.0
    %479 = vmatprep.subr.mxu0 0.0
    %480 = vmatpush1.msra.mxu0 0.0
    %481 = vmatprep.subr.mxu0 0.0
    %482 = vmatpush1.msra.mxu0 0.0
    %483 = vmatprep.subr.mxu0 0.0
    %484 = vmatpush1.msra.mxu0 0.0
    %485 = vmatprep.subr.mxu0 0.0
    %486 = vmatpush1.msra.mxu0 0.0
    %487 = vmatprep.subr.mxu0 0.0
    %488 = vmatpush1.msra.mxu0 0.0
    %489 = vmatprep.subr.mxu0 0.0
    %490 = vmatpush1.msra.mxu0 0.0
    %491 = vmatprep.subr.mxu0 0.0
    %492 = vmatpush1.msra.mxu0 0.0
    %493 = vmatprep.subr.mxu0 0.0
    %494 = vmatpush1.msra.mxu0 0.0
    %495 = vmatprep.subr.mxu0 0.0
    %496 = vmatpush1.msra.mxu0 0.0
    %497 = vmatprep.subr.mxu0 0.0
    %498 = vmatpush1.msra.mxu0 0.0
    %499 = vmatprep.subr.mxu0 0.0
    %500 = vmatpush1.msra.mxu0 0.0
    %501 = vmatprep.mubr.f32.mxu0 0.0
    %502 = vmatmul.mubr.f32.gmra.mrb[0].mxu0 %v435
    %v503 = vpop.f32.mrb[0].mxu0
    %v504 = vadd.f32 0.0, %v503
    %v505 = vpop.f32.mrb[0].mxu0
    %506 = vdwg.mxu0
    %v507 = vld [vmem:[#allocation8] sm:$0xff]
    %v508 = vld [vmem:[#allocation8 + $0x8] sm:$0xff]
    %v509 = vld [vmem:[#allocation8 + $0x10] sm:$0xff]
    %v510 = vld [vmem:[#allocation8 + $0x18] sm:$0xff]
    %v511 = vld [vmem:[#allocation8 + $0x20] sm:$0xff]
    %v512 = vld [vmem:[#allocation8 + $0x28] sm:$0xff]
    %v513 = vld [vmem:[#allocation8 + $0x30] sm:$0xff]
    %v514 = vld [vmem:[#allocation8 + $0x38] sm:$0xff]
    %v515 = vld [vmem:[%s2] sm:$0x3]
    %v516 = vld [vmem:[#allocation10] sm:$0xff]
    %v517 = vld [vmem:[#allocation10 + $0x8] sm:$0xff]
    %v518 = vld [vmem:[#allocation10 + $0x10] sm:$0xff]
    %v519 = vld [vmem:[#allocation10 + $0x18] sm:$0xff]
    %v521 = vsel %vm260, %v515, 0
    %523 = vmatprep.subr.mxu0 0.0
    %524 = vmatpush1.msra.mxu0 %v516
    %525 = vmatprep.subr.mxu0 0.0
    %526 = vmatpush1.msra.mxu0 %v517
    %527 = vmatprep.subr.mxu0 0.0
    %528 = vmatpush1.msra.mxu0 %v518
    %529 = vmatprep.subr.mxu0 0.0
    %530 = vmatpush1.msra.mxu0 %v519
    %531 = vmatprep.subr.mxu0 0.0
    %532 = vmatpush1.msra.mxu0 0.0
    %533 = vmatprep.subr.mxu0 0.0
    %534 = vmatpush1.msra.mxu0 0.0
    %535 = vmatprep.subr.mxu0 0.0
    %536 = vmatpush1.msra.mxu0 0.0
    %537 = vmatprep.subr.mxu0 0.0
    %538 = vmatpush1.msra.mxu0 0.0
    %539 = vmatprep.subr.mxu0 0.0
    %540 = vmatpush1.msra.mxu0 0.0
    %541 = vmatprep.subr.mxu0 0.0
    %542 = vmatpush1.msra.mxu0 0.0
    %543 = vmatprep.subr.mxu0 0.0
    %544 = vmatpush1.msra.mxu0 0.0
    %545 = vmatprep.subr.mxu0 0.0
    %546 = vmatpush1.msra.mxu0 0.0
    %547 = vmatprep.subr.mxu0 0.0
    %548 = vmatpush1.msra.mxu0 0.0
    %549 = vmatprep.subr.mxu0 0.0
    %550 = vmatpush1.msra.mxu0 0.0
    %551 = vmatprep.subr.mxu0 0.0
    %552 = vmatpush1.msra.mxu0 0.0
    %553 = vmatprep.subr.mxu0 0.0
    %554 = vmatpush1.msra.mxu0 0.0
    %555 = vmatprep.subr.mxu0 0.0
    %556 = vmatpush1.msra.mxu0 0.0
    %557 = vmatprep.subr.mxu0 0.0
    %558 = vmatpush1.msra.mxu0 0.0
    %559 = vmatprep.subr.mxu0 0.0
    %560 = vmatpush1.msra.mxu0 0.0
    %561 = vmatprep.subr.mxu0 0.0
    %562 = vmatpush1.msra.mxu0 0.0
    %563 = vmatprep.subr.mxu0 0.0
    %564 = vmatpush1.msra.mxu0 0.0
    %565 = vmatprep.subr.mxu0 0.0
    %566 = vmatpush1.msra.mxu0 0.0
    %567 = vmatprep.subr.mxu0 0.0
    %568 = vmatpush1.msra.mxu0 0.0
    %569 = vmatprep.subr.mxu0 0.0
    %570 = vmatpush1.msra.mxu0 0.0
    %571 = vmatprep.subr.mxu0 0.0
    %572 = vmatpush1.msra.mxu0 0.0
    %573 = vmatprep.subr.mxu0 0.0
    %574 = vmatpush1.msra.mxu0 0.0
    %575 = vmatprep.subr.mxu0 0.0
    %576 = vmatpush1.msra.mxu0 0.0
    %577 = vmatprep.subr.mxu0 0.0
    %578 = vmatpush1.msra.mxu0 0.0
    %579 = vmatprep.subr.mxu0 0.0
    %580 = vmatpush1.msra.mxu0 0.0
    %581 = vmatprep.subr.mxu0 0.0
    %582 = vmatpush1.msra.mxu0 0.0
    %583 = vmatprep.subr.mxu0 0.0
    %584 = vmatpush1.msra.mxu0 0.0
    %585 = vmatprep.subr.mxu0 0.0
    %586 = vmatpush1.msra.mxu0 0.0
    %587 = vmatprep.mubr.f32.mxu0 0.0
    %588 = vmatmul.mubr.f32.gmra.mrb[0].mxu0 %v521
    %v589 = vpop.f32.mrb[0].mxu0
    %v590 = vadd.f32 0.0, %v589
    %v591 = vpop.f32.mrb[0].mxu0
    %592 = vdwg.mxu0
    %v595 = vrot.slane %v504, 7
    %vm596 = vcmask 1041409
    %v597 = vsel %vm596, %v595, %v431
    %vm598 = vcmask 523264
    %v599 = vsel %vm598, %v597, 0
    %601 = vmatprep.subr.mxu0 0.0
    %602 = vmatpush1.msra.mxu0 %v507
    %603 = vmatprep.subr.mxu0 0.0
    %604 = vmatpush1.msra.mxu0 %v508
    %605 = vmatprep.subr.mxu0 0.0
    %606 = vmatpush1.msra.mxu0 %v509
    %607 = vmatprep.subr.mxu0 0.0
    %608 = vmatpush1.msra.mxu0 %v510
    %609 = vmatprep.subr.mxu0 0.0
    %610 = vmatpush1.msra.mxu0 %v511
    %611 = vmatprep.subr.mxu0 0.0
    %612 = vmatpush1.msra.mxu0 %v512
    %613 = vmatprep.subr.mxu0 0.0
    %614 = vmatpush1.msra.mxu0 %v513
    %615 = vmatprep.subr.mxu0 0.0
    %616 = vmatpush1.msra.mxu0 %v514
    %617 = vmatprep.subr.mxu0 0.0
    %618 = vmatpush1.msra.mxu0 0.0
    %619 = vmatprep.subr.mxu0 0.0
    %620 = vmatpush1.msra.mxu0 0.0
    %621 = vmatprep.subr.mxu0 0.0
    %622 = vmatpush1.msra.mxu0 0.0
    %623 = vmatprep.subr.mxu0 0.0
    %624 = vmatpush1.msra.mxu0 0.0
    %625 = vmatprep.subr.mxu0 0.0
    %626 = vmatpush1.msra.mxu0 0.0
    %627 = vmatprep.subr.mxu0 0.0
    %628 = vmatpush1.msra.mxu0 0.0
    %629 = vmatprep.subr.mxu0 0.0
    %630 = vmatpush1.msra.mxu0 0.0
    %631 = vmatprep.subr.mxu0 0.0
    %632 = vmatpush1.msra.mxu0 0.0
    %633 = vmatprep.subr.mxu0 0.0
    %634 = vmatpush1.msra.mxu0 0.0
    %635 = vmatprep.subr.mxu0 0.0
    %636 = vmatpush1.msra.mxu0 0.0
    %637 = vmatprep.subr.mxu0 0.0
    %638 = vmatpush1.msra.mxu0 0.0
    %639 = vmatprep.subr.mxu0 0.0
    %640 = vmatpush1.msra.mxu0 0.0
    %641 = vmatprep.subr.mxu0 0.0
    %642 = vmatpush1.msra.mxu0 0.0
    %643 = vmatprep.subr.mxu0 0.0
    %644 = vmatpush1.msra.mxu0 0.0
    %645 = vmatprep.subr.mxu0 0.0
    %646 = vmatpush1.msra.mxu0 0.0
    %647 = vmatprep.subr.mxu0 0.0
    %648 = vmatpush1.msra.mxu0 0.0
    %649 = vmatprep.subr.mxu0 0.0
    %650 = vmatpush1.msra.mxu0 0.0
    %651 = vmatprep.subr.mxu0 0.0
    %652 = vmatpush1.msra.mxu0 0.0
    %653 = vmatprep.subr.mxu0 0.0
    %654 = vmatpush1.msra.mxu0 0.0
    %655 = vmatprep.subr.mxu0 0.0
    %656 = vmatpush1.msra.mxu0 0.0
    %657 = vmatprep.subr.mxu0 0.0
    %658 = vmatpush1.msra.mxu0 0.0
    %659 = vmatprep.subr.mxu0 0.0
    %660 = vmatpush1.msra.mxu0 0.0
    %661 = vmatprep.subr.mxu0 0.0
    %662 = vmatpush1.msra.mxu0 0.0
    %663 = vmatprep.subr.mxu0 0.0
    %664 = vmatpush1.msra.mxu0 0.0
    %665 = vmatprep.mubr.f32.mxu0 0.0
    %666 = vmatmul.mubr.f32.gmra.mrb[0].mxu0 %v599
    %v667 = vpop.f32.mrb[0].mxu0
    %v668 = vadd.f32 %v590, %v667
    %v669 = vpop.f32.mrb[0].mxu0
    %670 = vdwg.mxu0
    %v671 = vld [vmem:[%s7] sm:$0x1]
    %v673 = vlaneseq
    %v674 = vshrl.u32 %v673, 7
    %v675 = vsub.s32 0, %v674
    %v676 = vrot.slane %v671, %v675
    %v678 = vadd.f32 %v668, %v676
    %679 = vst [vmem:[#allocation11] sm:$0x3] %v678
    // Predicated region
    $region54: #{tpu_custom_call.1} parent=1 // pred_check
      _
    $region55: #{tpu_custom_call.1} parent=1 // pred_check_branch
      %681 = sbr.rel (0) target = $region57
    $region56: #{tpu_custom_call.1} parent=1 // pred_region
      %s683 = ssub.s32 32, 32
      %684 = vsyncadd [#allocation4], %s683
      %s686 = sshll.u32 [#allocation11], 4
      %s687 = int_to_ptr.vmem [resolvable:$true] %s686
      %689 = dma.vmem_to_hbm [thread:$0]  %s687, 32, %s8, [#allocation4]
    $region57: #{tpu_custom_call.1} parent=1 // pred_fallthru
      _
    // Predicated region
    $region58: #{tpu_custom_call.1} parent=1 // pred_check
      _
    $region59: #{tpu_custom_call.1} parent=1 // pred_check_branch
      %691 = sbr.rel (0) target = $region61
    $region60: #{tpu_custom_call.1} parent=1 // pred_region
      %692 = dma.done [#allocation4], 32
    $region61: #{tpu_custom_call.1} parent=1 // pred_fallthru
      _
    %693 = vsyncpa [#allocation3], 1
    %694 = vsyncpa [#allocation6], 1
    %695 = vsyncpa [#allocation9], 1
    %696 = vsyncpa [#allocation4], 1

</llo_original>
